<compile_context>
chip_gen: v7x
topology: tpu7x:2x2x1
jax: 0.10.0
libtpu: 0.0.40
codegen_flags: <defaults>
</compile_context>

<pallas_src>
import functools

import jax
import jax.numpy as jnp
from jax import lax
from jax.experimental import pallas as pl
from jax.experimental.pallas import tpu as pltpu


def _round_up(x, m):
    return (x + m - 1) // m * m


# --------------------------- fused Pallas kernel ----------------------------

def _fused_conv_bn_relu_kernel(bt_ref, at_ref, gb_ref, out_ref,
                               sum_scr, sq_scr, *, m_valid, eps):
    """Per step: one conv GEMM tile + BN partial stats.  Last step: apply."""
    i = pl.program_id(0)
    nsteps = pl.num_programs(0)
    tm = at_ref.shape[1]

    @pl.when(i == 0)
    def _():
        sum_scr[...] = jnp.zeros_like(sum_scr)
        sq_scr[...] = jnp.zeros_like(sq_scr)

    # One conv GEMM tile on the MXU (bf16 inputs, f32 accumulation), in the
    # transposed (C_out, tm) orientation so stores stay lane-dense.
    y = jnp.dot(bt_ref[...], at_ref[...], preferred_element_type=jnp.float32)

    # Per-tile BatchNorm partial statistics.  Zero-padded A^T columns produce
    # exact zeros, so they contribute nothing to either accumulator; division
    # by the true M happens in the epilogue.
    sum_scr[...] += jnp.sum(y, axis=1, keepdims=True)
    sq_scr[...] += jnp.sum(y * y, axis=1, keepdims=True)

    # Write the tile straight into the resident output block (no scratch,
    # no VMEM->VMEM copy pass).
    off = pl.multiple_of(i * tm, 128)
    out_ref[:, pl.ds(off, tm)] = y.astype(out_ref.dtype)

    # Epilogue on the last grid step: scale/shift from batch stats + ReLU,
    # one tiled pass over the resident map (bounded vreg pressure).
    @pl.when(i == nsteps - 1)
    def _():
        inv_m = jnp.float32(1.0 / m_valid)
        mean = sum_scr[...] * inv_m
        # Training-mode (biased) variance via E[x^2] - E[x]^2; clamp >= 0 for
        # numerical safety, eps absorbs the rest.
        var = jnp.maximum(sq_scr[...] * inv_m - mean * mean, 0.0)
        scale = gb_ref[:, 0:1] * lax.rsqrt(var + eps)       # gamma * rsqrt
        shift = gb_ref[:, 1:2] - mean * scale                # beta - mean*scale

        def apply_tile(t, carry):
            o = pl.multiple_of(t * tm, 128)
            blk = out_ref[:, pl.ds(o, tm)].astype(jnp.float32)
            out_ref[:, pl.ds(o, tm)] = jnp.maximum(
                blk * scale + shift, 0.0).astype(out_ref.dtype)
            return carry

        lax.fori_loop(0, nsteps, apply_tile, 0, unroll=False)


def fused_conv_bn_relu(bt, at, gb, *, m_valid, eps, tm, out_dtype=jnp.float32):
    """relu(batchnorm(bt @ at)) with batch statistics; returns (C_out, M_pad)."""
    c_out, k_pad = bt.shape
    k_pad2, m_pad = at.shape
    assert k_pad == k_pad2 and m_pad % tm == 0
    num_tiles = m_pad // tm

    # VMEM budget: resident output + double-buffered streamed inputs, with 2x
    # headroom; clamped to stay safe on v7x (64 MiB physical VMEM).
    out_bytes = c_out * m_pad * jnp.dtype(out_dtype).itemsize
    in_bytes = 2 * (k_pad * tm + c_out * k_pad) * at.dtype.itemsize
    vmem_limit = int(min(48 * 2**20, max(32 * 2**20, 2 * (out_bytes + in_bytes))))

    kernel = functools.partial(_fused_conv_bn_relu_kernel,
                               m_valid=m_valid, eps=eps)
    return pl.pallas_call(
        kernel,
        out_shape=jax.ShapeDtypeStruct((c_out, m_pad), out_dtype),
        grid_spec=pltpu.PrefetchScalarGridSpec(
            num_scalar_prefetch=0,
            grid=(num_tiles,),
            in_specs=[
                pl.BlockSpec((c_out, k_pad), lambda i: (0, 0)),   # W^T (bf16)
                # A^T tile: the only streamed operand.
                # TODO(synk): sweep pipeline_mode=pl.Buffered(3) on v5e.
                pl.BlockSpec((k_pad, tm), lambda i: (0, i)),
                pl.BlockSpec((c_out, 2), lambda i: (0, 0)),       # [gamma|beta]
            ],
            # Whole output is one VMEM-resident block (constant index map).
            out_specs=pl.BlockSpec((c_out, m_pad), lambda i: (0, 0)),
            scratch_shapes=[pltpu.VMEM((c_out, 1), jnp.float32),   # sum
                            pltpu.VMEM((c_out, 1), jnp.float32)],  # sum of sq
        ),
        compiler_params=pltpu.CompilerParams(
            # Output block is revisited across the M-tile axis -> "arbitrary".
            # TODO(synk): this pins the kernel to one TensorCore on v7x; to
            # use both, split M across a leading "parallel" axis with
            # per-core partial stats plus a tiny combine/apply pass.
            dimension_semantics=("arbitrary",),
            vmem_limit_bytes=vmem_limit),
    )(bt, at, gb)


# ------------------------------ JAX wrapper ---------------------------------

@functools.partial(jax.jit,
                   static_argnames=("kernel_size", "stride", "padding",
                                    "dilation", "eps", "tm", "compute_dtype",
                                    "out_dtype"))
def basic_conv_forward(x_nchw, weight_oihw, gamma, beta, *,
                       kernel_size, stride=1, padding=0, dilation=1,
                       eps=1e-5, tm=None, compute_dtype=jnp.bfloat16,
                       out_dtype=jnp.float32):
    """BasicConv forward: conv2d(no bias) -> BatchNorm2d(batch stats) -> ReLU."""
    n, c_in, h, w = x_nchw.shape
    c_out, c_in_w, kh, kw = weight_oihw.shape
    assert kh == kernel_size and kw == kernel_size
    # TODO(synk): grouped convolution (groups > 1) is not implemented.
    assert c_in_w == c_in, "groups > 1 not supported"

    ho = (h + 2 * padding - dilation * (kh - 1) - 1) // stride + 1
    wo = (w + 2 * padding - dilation * (kw - 1) - 1) // stride + 1
    m = n * ho * wo
    k = kh * kw * c_in

    # Transposed im2col in XLA: A^T[K, M] with K ordered (kh, kw, c_in).
    # TODO(synk): for realistic conv sizes move this unfold into the kernel
    # (stream padded-input row tiles and accumulate kh*kw shifted matmuls) to
    # avoid the ~kh*kw x HBM amplification of the materialized A^T buffer.
    xp = jnp.pad(x_nchw, ((0, 0), (0, 0),
                          (padding, padding), (padding, padding)))
    patches = []
    for i in range(kh):
        for j in range(kw):
            patches.append(
                xp[:, :,
                   i * dilation: i * dilation + stride * (ho - 1) + 1: stride,
                   j * dilation: j * dilation + stride * (wo - 1) + 1: stride])
    at = jnp.stack(patches, axis=0)                   # (kh*kw, N, C_in, Ho, Wo)
    at = jnp.transpose(at, (0, 2, 1, 3, 4)).reshape(k, m)

    # OIHW -> (C_out, K) with matching K ordering (kh, kw, c_in).
    bt = jnp.transpose(weight_oihw, (0, 2, 3, 1)).reshape(c_out, k)

    # Pad to MXU / lane friendly sizes; cast GEMM inputs to bf16 (f32 accum).
    # K stays padded only to 16: the kernel is memory-bound, extra MXU-shaped
    # padding would just add traffic.
    if tm is None:
        tm = min(2048, _round_up(m, 128))
    tm = _round_up(tm, 128)
    k_pad = _round_up(k, 16)
    m_pad = _round_up(m, tm)
    at = jnp.pad(at, ((0, k_pad - k), (0, m_pad - m))).astype(compute_dtype)
    bt = jnp.pad(bt, ((0, 0), (0, k_pad - k))).astype(compute_dtype)

    # Fold gamma/beta into a single (C_out, 2) f32 block.
    gb = jnp.stack([gamma.astype(jnp.float32),
                    beta.astype(jnp.float32)], axis=1)

    y_t = fused_conv_bn_relu(bt, at, gb, m_valid=m, eps=eps, tm=tm,
                             out_dtype=out_dtype)          # (C_out, M_pad)

    # Drop padding; NCHW transpose stays in XLA (the kernel output stays
    # lane-dense this way).
    out = y_t[:, :m].reshape(c_out, n, ho, wo)
    return jnp.transpose(out, (1, 0, 2, 3))


# --------------------------------- main -------------------------------------

if __name__ == "__main__":
    def _reference(x, weight, gamma, beta, stride, padding, dilation, eps=1e-5):
        conv = lax.conv_general_dilated(
            x, weight, window_strides=(stride, stride),
            padding=((padding, padding), (padding, padding)),
            rhs_dilation=(dilation, dilation),
            dimension_numbers=("NCHW", "OIHW", "NCHW"))
        mu = conv.mean(axis=(0, 2, 3), keepdims=True)
        var = jnp.mean((conv - mu) ** 2, axis=(0, 2, 3), keepdims=True)
        y = (conv - mu) * lax.rsqrt(var + eps)
        y = y * gamma[None, :, None, None] + beta[None, :, None, None]
        return jnp.maximum(y, 0.0)

    key = jax.random.PRNGKey(0)

    # Config 1: BasicConv(4, 8, kernel_size=3, stride=1, padding=1).
    N, C_IN, H, W = 2, 4, 16, 16
    C_OUT, KS, STRIDE, PAD, DIL = 8, 3, 1, 1, 1
    k1, k2, k3, k4, key = jax.random.split(key, 5)
    x = jax.random.normal(k1, (N, C_IN, H, W), dtype=jnp.float32)
    weight = 0.1 * jax.random.normal(k2, (C_OUT, C_IN, KS, KS), dtype=jnp.float32)
    gamma = 1.0 + 0.1 * jax.random.normal(k3, (C_OUT,), dtype=jnp.float32)
    beta = 0.1 * jax.random.normal(k4, (C_OUT,), dtype=jnp.float32)

    out = basic_conv_forward(x, weight, gamma, beta, kernel_size=KS,
                             stride=STRIDE, padding=PAD, dilation=DIL)
    out = jax.block_until_ready(out)
    ref = _reference(x, weight, gamma, beta, STRIDE, PAD, DIL)
    assert out.shape == (N, C_OUT, H, W)
    # bf16 MXU inputs with f32 accumulation -> slightly looser tolerance.
    assert jnp.allclose(out, ref, rtol=2e-2, atol=2e-2), \
        "mismatch vs reference (config 1)"

    # Same problem with a smaller tile (multi-step grid) must agree (partial
    # BN-stat accumulation order differs slightly between tilings).
    out_tiled = basic_conv_forward(x, weight, gamma, beta, kernel_size=KS,
                                   stride=STRIDE, padding=PAD, dilation=DIL,
                                   tm=128)
    out_tiled = jax.block_until_ready(out_tiled)
    assert jnp.allclose(out, out_tiled, rtol=1e-4, atol=1e-4), \
        "single-tile vs tm=128 mismatch"

    # Config 2: exercises M/K zero-padding + unmasked stats (M=81, K=27).
    N2, C2_IN, H2, W2, C2_OUT = 1, 3, 9, 9, 16
    k1, k2, k3, k4, key = jax.random.split(key, 5)
    x2 = jax.random.normal(k1, (N2, C2_IN, H2, W2), dtype=jnp.float32)
    w2 = 0.1 * jax.random.normal(k2, (C2_OUT, C2_IN, KS, KS), dtype=jnp.float32)
    g2 = 1.0 + 0.1 * jax.random.normal(k3, (C2_OUT,), dtype=jnp.float32)
    b2 = 0.1 * jax.random.normal(k4, (C2_OUT,), dtype=jnp.float32)
    out2 = basic_conv_forward(x2, w2, g2, b2, kernel_size=KS,
                              stride=STRIDE, padding=PAD, dilation=DIL)
    out2 = jax.block_until_ready(out2)
    ref2 = _reference(x2, w2, g2, b2, STRIDE, PAD, DIL)
    assert out2.shape == (N2, C2_OUT, H2, W2)
    assert jnp.allclose(out2, ref2, rtol=2e-2, atol=2e-2), \
        "mismatch vs reference (config 2)"

    print("KERNEL_OK")
</pallas_src>

<mosaic_0001>
module attributes {stable_mosaic.version = 11 : i64} {
  func.func @_fused_conv_bn_relu_kernel(%arg0: i32, %arg1: memref<8x48xbf16, #tpu.memory_space<vmem>>, %arg2: memref<48x512xbf16, #tpu.memory_space<vmem>>, %arg3: memref<8x2xf32, #tpu.memory_space<vmem>>, %arg4: memref<8x512xf32, #tpu.memory_space<vmem>>, %arg5: memref<8x1xf32, #tpu.memory_space<vmem>>, %arg6: memref<8x1xf32, #tpu.memory_space<vmem>>) attributes {dimension_semantics = [#tpu.dimension_semantics<arbitrary>], iteration_bounds = array<i64: 1>, scalar_prefetch = 0 : i64, scratch_operands = 2 : i64, tpu.core_type = #tpu.core_type<tc>, window_params = [{pipeline_mode = #tpu.pipeline_mode<synchronous>, transform_indices = @transform_0, window_bounds = array<i64: 8, 48>}, {transform_indices = @transform_1, window_bounds = array<i64: 48, 512>}, {pipeline_mode = #tpu.pipeline_mode<synchronous>, transform_indices = @transform_2, window_bounds = array<i64: 8, 2>}, {pipeline_mode = #tpu.pipeline_mode<synchronous>, transform_indices = @transform_3, window_bounds = array<i64: 8, 512>}]} {
    %c0_i32 = arith.constant 0 : i32
    %0 = arith.cmpi eq, %arg0, %c0_i32 : i32
    %1 = arith.extui %0 : i1 to i32
    %c0_i32_0 = arith.constant 0 : i32
    %2 = arith.cmpi ne, %1, %c0_i32_0 : i32
    scf.if %2 {
      %cst_17 = arith.constant 0.000000e+00 : f32
      %24 = vector.broadcast %cst_17 : f32 to vector<8x1xf32>
      %c0_18 = arith.constant 0 : index
      %c0_19 = arith.constant 0 : index
      %25 = vector.load %arg5[%c0_18, %c0_19] : memref<8x1xf32, #tpu.memory_space<vmem>>, vector<8x1xf32>
      tpu.vector_store %arg5[%c0_18, %c0_19], %24 {strides = array<i32>} : memref<8x1xf32, #tpu.memory_space<vmem>>, vector<8x1xf32>,
      %cst_20 = arith.constant 0.000000e+00 : f32
      %26 = vector.broadcast %cst_20 : f32 to vector<8x1xf32>
      %c0_21 = arith.constant 0 : index
      %c0_22 = arith.constant 0 : index
      %27 = vector.load %arg6[%c0_21, %c0_22] : memref<8x1xf32, #tpu.memory_space<vmem>>, vector<8x1xf32>
      tpu.vector_store %arg6[%c0_21, %c0_22], %26 {strides = array<i32>} : memref<8x1xf32, #tpu.memory_space<vmem>>, vector<8x1xf32>,
    } else {
    }
    %c0 = arith.constant 0 : index
    %c0_1 = arith.constant 0 : index
    %3 = vector.load %arg1[%c0, %c0_1] : memref<8x48xbf16, #tpu.memory_space<vmem>>, vector<8x48xbf16>
    %c0_2 = arith.constant 0 : index
    %c0_3 = arith.constant 0 : index
    %4 = vector.load %arg2[%c0_2, %c0_3] : memref<48x512xbf16, #tpu.memory_space<vmem>>, vector<48x512xbf16>
    %cst = arith.constant dense<0.000000e+00> : vector<8x512xf32>
    %5 = tpu.matmul %3, %4, %cst {dimension_numbers = #tpu.dot_dimension_numbers<[1], [0], [0], [1], [0, 0, 1, 1], [], []>} : vector<8x48xbf16>, vector<48x512xbf16>, vector<8x512xf32> -> vector<8x512xf32>
    %c0_4 = arith.constant 0 : index
    %c0_5 = arith.constant 0 : index
    %6 = vector.load %arg5[%c0_4, %c0_5] : memref<8x1xf32, #tpu.memory_space<vmem>>, vector<8x1xf32>
    %cst_6 = arith.constant dense<0.000000e+00> : vector<8xf32>
    %7 = vector.multi_reduction <add>, %5, %cst_6 [1] : vector<8x512xf32> to vector<8xf32>
    %8 = vector.shape_cast %7 : vector<8xf32> to vector<8x1xf32>
    %9 = arith.addf %6, %8 : vector<8x1xf32>
    %c0_7 = arith.constant 0 : index
    %c0_8 = arith.constant 0 : index
    %10 = vector.load %arg5[%c0_7, %c0_8] : memref<8x1xf32, #tpu.memory_space<vmem>>, vector<8x1xf32>
    tpu.vector_store %arg5[%c0_7, %c0_8], %9 {strides = array<i32>} : memref<8x1xf32, #tpu.memory_space<vmem>>, vector<8x1xf32>,
    %c0_9 = arith.constant 0 : index
    %c0_10 = arith.constant 0 : index
    %11 = vector.load %arg6[%c0_9, %c0_10] : memref<8x1xf32, #tpu.memory_space<vmem>>, vector<8x1xf32>
    %12 = arith.mulf %5, %5 : vector<8x512xf32>
    %cst_11 = arith.constant dense<0.000000e+00> : vector<8xf32>
    %13 = vector.multi_reduction <add>, %12, %cst_11 [1] : vector<8x512xf32> to vector<8xf32>
    %14 = vector.shape_cast %13 : vector<8xf32> to vector<8x1xf32>
    %15 = arith.addf %11, %14 : vector<8x1xf32>
    %c0_12 = arith.constant 0 : index
    %c0_13 = arith.constant 0 : index
    %16 = vector.load %arg6[%c0_12, %c0_13] : memref<8x1xf32, #tpu.memory_space<vmem>>, vector<8x1xf32>
    tpu.vector_store %arg6[%c0_12, %c0_13], %15 {strides = array<i32>} : memref<8x1xf32, #tpu.memory_space<vmem>>, vector<8x1xf32>,
    %c512_i32 = arith.constant 512 : i32
    %17 = arith.muli %arg0, %c512_i32 : i32
    %18 = tpu.assume_multiple %17, 128 : i32
    %c0_14 = arith.constant 0 : index
    %19 = arith.index_cast %18 : i32 to index
    %20 = vector.load %arg4[%c0_14, %19] : memref<8x512xf32, #tpu.memory_space<vmem>>, vector<8x512xf32>
    tpu.vector_store %arg4[%c0_14, %19], %5 {strides = array<i32>} : memref<8x512xf32, #tpu.memory_space<vmem>>, vector<8x512xf32>,
    %c0_i32_15 = arith.constant 0 : i32
    %21 = arith.cmpi eq, %arg0, %c0_i32_15 : i32
    %22 = arith.extui %21 : i1 to i32
    %c0_i32_16 = arith.constant 0 : i32
    %23 = arith.cmpi ne, %22, %c0_i32_16 : i32
    scf.if %23 {
      %c0_17 = arith.constant 0 : index
      %c0_18 = arith.constant 0 : index
      %24 = vector.load %arg5[%c0_17, %c0_18] : memref<8x1xf32, #tpu.memory_space<vmem>>, vector<8x1xf32>
      %cst_19 = arith.constant 0.001953125 : f32
      %25 = vector.broadcast %cst_19 : f32 to vector<8x1xf32>
      %26 = arith.mulf %24, %25 : vector<8x1xf32>
      %c0_20 = arith.constant 0 : index
      %c0_21 = arith.constant 0 : index
      %27 = vector.load %arg6[%c0_20, %c0_21] : memref<8x1xf32, #tpu.memory_space<vmem>>, vector<8x1xf32>
      %cst_22 = arith.constant 0.001953125 : f32
      %28 = vector.broadcast %cst_22 : f32 to vector<8x1xf32>
      %29 = arith.mulf %27, %28 : vector<8x1xf32>
      %30 = arith.mulf %26, %26 : vector<8x1xf32>
      %31 = arith.subf %29, %30 : vector<8x1xf32>
      %cst_23 = arith.constant 0.000000e+00 : f32
      %32 = vector.broadcast %cst_23 : f32 to vector<8x1xf32>
      %33 = arith.maximumf %31, %32 : vector<8x1xf32>
      %c0_24 = arith.constant 0 : index
      %c0_25 = arith.constant 0 : index
      %34 = vector.load %arg3[%c0_24, %c0_25] : memref<8x2xf32, #tpu.memory_space<vmem>>, vector<8x1xf32>
      %cst_26 = arith.constant 9.99999974E-6 : f32
      %35 = vector.broadcast %cst_26 : f32 to vector<8x1xf32>
      %36 = arith.addf %33, %35 : vector<8x1xf32>
      %37 = math.rsqrt %36 : vector<8x1xf32>
      %38 = arith.mulf %34, %37 : vector<8x1xf32>
      %c0_27 = arith.constant 0 : index
      %c1 = arith.constant 1 : index
      %39 = vector.load %arg3[%c0_27, %c1] : memref<8x2xf32, #tpu.memory_space<vmem>>, vector<8x1xf32>
      %40 = arith.mulf %26, %38 : vector<8x1xf32>
      %41 = arith.subf %39, %40 : vector<8x1xf32>
      %c0_i32_28 = arith.constant 0 : i32
      %c512_i32_29 = arith.constant 512 : i32
      %42 = arith.muli %c0_i32_28, %c512_i32_29 : i32
      %43 = tpu.assume_multiple %42, 128 : i32
      %c0_30 = arith.constant 0 : index
      %44 = arith.index_cast %43 : i32 to index
      %45 = vector.load %arg4[%c0_30, %44] : memref<8x512xf32, #tpu.memory_space<vmem>>, vector<8x512xf32>
      %46 = vector.broadcast %38 : vector<8x1xf32> to vector<8x512xf32>
      %47 = arith.mulf %45, %46 : vector<8x512xf32>
      %48 = vector.broadcast %41 : vector<8x1xf32> to vector<8x512xf32>
      %49 = arith.addf %47, %48 : vector<8x512xf32>
      %cst_31 = arith.constant 0.000000e+00 : f32
      %50 = vector.broadcast %cst_31 : f32 to vector<8x512xf32>
      %51 = arith.maximumf %49, %50 : vector<8x512xf32>
      %c0_32 = arith.constant 0 : index
      %52 = arith.index_cast %43 : i32 to index
      %53 = vector.load %arg4[%c0_32, %52] : memref<8x512xf32, #tpu.memory_space<vmem>>, vector<8x512xf32>
      tpu.vector_store %arg4[%c0_32, %52], %51 {strides = array<i32>} : memref<8x512xf32, #tpu.memory_space<vmem>>, vector<8x512xf32>,
      %c1_i32 = arith.constant 1 : i32
    } else {
    }
    return
  }
  func.func @transform_0(%arg0: i32) -> (i32, i32) {
    %c0_i32 = arith.constant 0 : i32
    %c0_i32_0 = arith.constant 0 : i32
    %c0_i32_1 = arith.constant 0 : i32
    return %c0_i32, %c0_i32_0 : i32, i32
  }
  func.func @transform_1(%arg0: i32) -> (i32, i32) {
    %c0_i32 = arith.constant 0 : i32
    %c0_i32_0 = arith.constant 0 : i32
    return %c0_i32, %arg0 : i32, i32
  }
  func.func @transform_2(%arg0: i32) -> (i32, i32) {
    %c0_i32 = arith.constant 0 : i32
    %c0_i32_0 = arith.constant 0 : i32
    %c0_i32_1 = arith.constant 0 : i32
    return %c0_i32, %c0_i32_0 : i32, i32
  }
  func.func @transform_3(%arg0: i32) -> (i32, i32) {
    %c0_i32 = arith.constant 0 : i32
    %c0_i32_0 = arith.constant 0 : i32
    %c0_i32_1 = arith.constant 0 : i32
    return %c0_i32, %c0_i32_0 : i32, i32
  }
}

</mosaic_0001>

<llo_original>
// kernel: basic_conv_forward.1
$region0: #{basic_conv_forward.1}
  #allocation0 [shape = 'u32[]', space=smem, size = 0x4, offset = 0x4, fixed_abs, tag = 'smem constant byte address 0x4 - core index']
  #allocation1 [shape = 'u32[144,128]{1,0:T(1,128)}', space=vmem, size = 0x12000, scoped, tag = 'internal scratch']
  #allocation2 [shape = 'f32[8,1]{1,0:T(8,128)}', space=vmem, size = 0x1000, scoped, tag = 'scratch operand']
  #allocation3 [shape = 'f32[8,1]{1,0:T(8,128)}', space=vmem, size = 0x1000, scoped, tag = 'scratch operand']
  %s0 = inlined_call_operand.vmem [shape: bf16[8,48], index: 0, kind: input, shape index: {}]
  %s1 = inlined_call_operand.vmem [shape: bf16[48,512], index: 1, kind: input, shape index: {}]
  %s2 = inlined_call_operand.vmem [shape: f32[8,2], index: 2, kind: input, shape index: {}]
  %s3 = inlined_call_operand.vmem [shape: f32[8,512], index: 3, kind: output, shape index: {}]
  %s4 = sld [smem:[#allocation0]]
  $region30: #{basic_conv_forward.1} parent=0
    _
  %s6 = ssub.s32 1, %s4
  %s7 = scalar_select 0, %s6, %s4
  // Predicated region
  $region2: #{basic_conv_forward.1} parent=0 // pred_check
    _
  $region3: #{basic_conv_forward.1} parent=0 // pred_check_branch
    %9 = sbr.rel (0) target = $region5
  $region4: #{basic_conv_forward.1} parent=0 // pred_region
    _
  $region5: #{basic_conv_forward.1} parent=0 // pred_fallthru
    _
  // Predicated region
  $region6: #{basic_conv_forward.1} parent=0 // pred_check
    _
  $region7: #{basic_conv_forward.1} parent=0 // pred_check_branch
    %11 = sbr.rel (0) target = $region9
  $region8: #{basic_conv_forward.1} parent=0 // pred_region
    _
  $region9: #{basic_conv_forward.1} parent=0 // pred_fallthru
    _
  // Predicated region
  $region10: #{basic_conv_forward.1} parent=0 // pred_check
    _
  $region11: #{basic_conv_forward.1} parent=0 // pred_check_branch
    %13 = sbr.rel (0) target = $region13
  $region12: #{basic_conv_forward.1} parent=0 // pred_region
    _
  $region13: #{basic_conv_forward.1} parent=0 // pred_fallthru
    _
  %p15 = scmp.eq.s32.totalorder 0, 0
  // Predicated region
  $region14: #{basic_conv_forward.1} parent=0 // pred_check
    %p16 = pneg %p15
  $region15: #{basic_conv_forward.1} parent=0 // pred_check_branch
    %18 = sbr.rel (%p16) target = $region17
  $region16: #{basic_conv_forward.1} parent=0 // pred_region
    %vm19 = vcmask 7168
    %20 = vst.msk [vmem:[#allocation2] sm:$0xff] %vm19, 0.0
    %21 = vst.msk [vmem:[#allocation3] sm:$0xff] %vm19, 0.0
  $region17: #{basic_conv_forward.1} parent=0 // pred_fallthru
    _
  %v22 = vld [vmem:[%s0] sm:$0xf]
  %v23 = vld [vmem:[%s1] sm:$0xff]
  %v24 = vld [vmem:[%s1 + $0x8] sm:$0xff]
  %v25 = vld [vmem:[%s1 + $0x10] sm:$0xff]
  %v26 = vld [vmem:[%s1 + $0x18] sm:$0xff]
  %v27 = vld [vmem:[%s1 + $0x20] sm:$0xff]
  %v28 = vld [vmem:[%s1 + $0x28] sm:$0xff]
  %v29 = vld [vmem:[%s1 + $0x30] sm:$0xff]
  %v30 = vld [vmem:[%s1 + $0x38] sm:$0xff]
  %v31 = vld [vmem:[%s1 + $0x40] sm:$0xff]
  %v32 = vld [vmem:[%s1 + $0x48] sm:$0xff]
  %v33 = vld [vmem:[%s1 + $0x50] sm:$0xff]
  %v34 = vld [vmem:[%s1 + $0x58] sm:$0xff]
  %v47 = vunpack.c.l.b16 %v23
  %v48 = vunpack.c.h.b16 %v23
  %v49 = vunpack.c.l.b16 %v24
  %v50 = vunpack.c.h.b16 %v24
  %v51 = vunpack.c.l.b16 %v25
  %v52 = vunpack.c.h.b16 %v25
  %v53 = vunpack.c.l.b16 %v26
  %v54 = vunpack.c.h.b16 %v26
  %v55 = vunpack.c.l.b16 %v27
  %v56 = vunpack.c.h.b16 %v27
  %v57 = vunpack.c.l.b16 %v28
  %v58 = vunpack.c.h.b16 %v28
  %v59 = vunpack.c.l.b16 %v29
  %v60 = vunpack.c.h.b16 %v29
  %v61 = vunpack.c.l.b16 %v30
  %v62 = vunpack.c.h.b16 %v30
  %v63 = vunpack.c.l.b16 %v31
  %v64 = vunpack.c.h.b16 %v31
  %v65 = vunpack.c.l.b16 %v32
  %v66 = vunpack.c.h.b16 %v32
  %v67 = vunpack.c.l.b16 %v33
  %v68 = vunpack.c.h.b16 %v33
  %v69 = vunpack.c.l.b16 %v34
  %v70 = vunpack.c.h.b16 %v34
  %v71 = vpack.c.b16 %v51, %v47
  %v72 = vpack.c.b16 %v52, %v48
  %v73 = vpack.c.b16 %v53, %v49
  %v74 = vpack.c.b16 %v54, %v50
  %v75 = vpack.c.b16 %v59, %v55
  %v76 = vpack.c.b16 %v60, %v56
  %v77 = vpack.c.b16 %v61, %v57
  %v78 = vpack.c.b16 %v62, %v58
  %v79 = vpack.c.b16 %v67, %v63
  %v80 = vpack.c.b16 %v68, %v64
  %v81 = vpack.c.b16 %v69, %v65
  %v82 = vpack.c.b16 %v70, %v66
  %vm95 = vcmask 392192
  %v97 = vsel %vm95, %v22, 0
  %99 = vmatprep.subr.bf16.mxu0 %v72
  %100 = vmatpush1.bf16.msra.mxu0 %v71
  %101 = vmatprep.subr.bf16.mxu0 %v76
  %102 = vmatpush1.bf16.msra.mxu0 %v75
  %103 = vmatprep.subr.bf16.mxu0 %v80
  %104 = vmatpush1.bf16.msra.mxu0 %v79
  %105 = vmatprep.subr.bf16.mxu0 0
  %106 = vmatpush1.bf16.msra.mxu0 0
  %107 = vmatprep.subr.bf16.mxu0 0
  %108 = vmatpush1.bf16.msra.mxu0 0
  %109 = vmatprep.subr.bf16.mxu0 0
  %110 = vmatpush1.bf16.msra.mxu0 0
  %111 = vmatprep.subr.bf16.mxu0 0
  %112 = vmatpush1.bf16.msra.mxu0 0
  %113 = vmatprep.subr.bf16.mxu0 0
  %114 = vmatpush1.bf16.msra.mxu0 0
  %115 = vmatprep.subr.bf16.mxu0 0
  %116 = vmatpush1.bf16.msra.mxu0 0
  %117 = vmatprep.subr.bf16.mxu0 0
  %118 = vmatpush1.bf16.msra.mxu0 0
  %119 = vmatprep.subr.bf16.mxu0 0
  %120 = vmatpush1.bf16.msra.mxu0 0
  %121 = vmatprep.subr.bf16.mxu0 0
  %122 = vmatpush1.bf16.msra.mxu0 0
  %123 = vmatprep.subr.bf16.mxu0 0
  %124 = vmatpush1.bf16.msra.mxu0 0
  %125 = vmatprep.subr.bf16.mxu0 0
  %126 = vmatpush1.bf16.msra.mxu0 0
  %127 = vmatprep.subr.bf16.mxu0 0
  %128 = vmatpush1.bf16.msra.mxu0 0
  %129 = vmatprep.subr.bf16.mxu0 0
  %130 = vmatpush1.bf16.msra.mxu0 0
  %131 = vmatprep.mubr.bf16.mxu0 0
  %132 = vmatmul.mubr.bf16.gmra.mrb[0].mxu0 %v97
  %v133 = vpop.f32.mrb[0].mxu0
  %v134 = vadd.f32 0.0, %v133
  %v135 = vpop.f32.mrb[0].mxu0
  %v136 = vadd.f32 0.0, %v135
  %v137 = vpop.f32.mrb[0].mxu0
  %v138 = vpop.f32.mrb[0].mxu0
  %139 = vdwg.mxu0
  %140 = vmatprep.subr.bf16.mxu0 %v74
  %141 = vmatpush1.bf16.msra.mxu0 %v73
  %142 = vmatprep.subr.bf16.mxu0 %v78
  %143 = vmatpush1.bf16.msra.mxu0 %v77
  %144 = vmatprep.subr.bf16.mxu0 %v82
  %145 = vmatpush1.bf16.msra.mxu0 %v81
  %146 = vmatprep.subr.bf16.mxu0 0
  %147 = vmatpush1.bf16.msra.mxu0 0
  %148 = vmatprep.subr.bf16.mxu0 0
  %149 = vmatpush1.bf16.msra.mxu0 0
  %150 = vmatprep.subr.bf16.mxu0 0
  %151 = vmatpush1.bf16.msra.mxu0 0
  %152 = vmatprep.subr.bf16.mxu0 0
  %153 = vmatpush1.bf16.msra.mxu0 0
  %154 = vmatprep.subr.bf16.mxu0 0
  %155 = vmatpush1.bf16.msra.mxu0 0
  %156 = vmatprep.subr.bf16.mxu0 0
  %157 = vmatpush1.bf16.msra.mxu0 0
  %158 = vmatprep.subr.bf16.mxu0 0
  %159 = vmatpush1.bf16.msra.mxu0 0
  %160 = vmatprep.subr.bf16.mxu0 0
  %161 = vmatpush1.bf16.msra.mxu0 0
  %162 = vmatprep.subr.bf16.mxu0 0
  %163 = vmatpush1.bf16.msra.mxu0 0
  %164 = vmatprep.subr.bf16.mxu0 0
  %165 = vmatpush1.bf16.msra.mxu0 0
  %166 = vmatprep.subr.bf16.mxu0 0
  %167 = vmatpush1.bf16.msra.mxu0 0
  %168 = vmatprep.subr.bf16.mxu0 0
  %169 = vmatpush1.bf16.msra.mxu0 0
  %170 = vmatprep.subr.bf16.mxu0 0
  %171 = vmatpush1.bf16.msra.mxu0 0
  %172 = vmatprep.mubr.bf16.mxu0 0
  %173 = vmatmul.mubr.bf16.gmra.mrb[0].mxu0 %v97
  %v174 = vpop.f32.mrb[0].mxu0
  %v175 = vadd.f32 0.0, %v174
  %v176 = vpop.f32.mrb[0].mxu0
  %v177 = vadd.f32 0.0, %v176
  %v178 = vpop.f32.mrb[0].mxu0
  %v179 = vpop.f32.mrb[0].mxu0
  %180 = vdwg.mxu0
  %v181 = vld [vmem:[#allocation2] sm:$0xff]
  %v182 = vadd.f32 %v134, %v136
  %v183 = vadd.f32 %v182, %v175
  %v184 = vadd.f32 %v183, %v177
  %185 = vadd.xlane.f32.xlu0 %v184
  %v186 = vpop.xlane.xlu0 %185
  %v187 = vadd.f32 %v181, %v186
  %vm188 = vcmask 7168
  %189 = vst.msk [vmem:[#allocation2] sm:$0xff] %vm188, %v187
  %v190 = vld [vmem:[#allocation3] sm:$0xff]
  %v191 = vmul.f32 %v134, %v134
  %v192 = vmul.f32 %v136, %v136
  %v193 = vmul.f32 %v175, %v175
  %v194 = vmul.f32 %v177, %v177
  %v195 = vadd.f32 %v191, %v192
  %v196 = vadd.f32 %v195, %v193
  %v197 = vadd.f32 %v196, %v194
  %198 = vadd.xlane.f32.xlu0 %v197
  %v199 = vpop.xlane.xlu0 %198
  %v200 = vadd.f32 %v190, %v199
  %201 = vst.msk [vmem:[#allocation3] sm:$0xff] %vm188, %v200
  %s202 = smul.u32 0, 512
  %s203 = sshra.s32 %s202, 7
  %s204 = sand.u32 %s202, 127
  %s205 = smul.addr %s203, 8
  %s206 = scalar_lea.vmem %s3, %s205
  %207 = vst [vmem:[%s206] sm:$0xff] %v134
  %208 = vst [vmem:[%s206 + $0x8] sm:$0xff] %v136
  %209 = vst [vmem:[%s206 + $0x10] sm:$0xff] %v175
  %210 = vst [vmem:[%s206 + $0x18] sm:$0xff] %v177
  // Predicated region
  $region18: #{basic_conv_forward.1} parent=0 // pred_check
    %p211 = pneg %p15
  $region19: #{basic_conv_forward.1} parent=0 // pred_check_branch
    %213 = sbr.rel (%p211) target = $region21
  $region20: #{basic_conv_forward.1} parent=0 // pred_region
    %v214 = vld [vmem:[#allocation2] sm:$0xff]
    %v215 = vmul.f32 %v214, 0.001953125
    %v216 = vld [vmem:[#allocation3] sm:$0xff]
    %v217 = vmul.f32 %v216, 0.001953125
    %v218 = vmul.f32 %v215, %v215
    %v219 = vsub.f32 %v217, %v218
    %v220 = vmax.f32 %v219, 0.0
    %v221 = vld [vmem:[%s2] sm:$0xff]
    %v222 = vadd.f32 %v220, 1e-05
    %v223 = vrsqrt.pop %v222
    %v224 = vmul.f32 %v221, %v223
    %v225 = vmul.f32 %v215, %v224
    %227 = vrot.lane.b32.xlu0 %v225, 1
    %v228 = vpop.permute.xlu0 %227
    %v230 = vsub.f32 %v221, %v228
    %v231 = vld [vmem:[%s3] sm:$0xff]
    %v232 = vld [vmem:[%s3 + $0x8] sm:$0xff]
    %v233 = vld [vmem:[%s3 + $0x10] sm:$0xff]
    %v234 = vld [vmem:[%s3 + $0x18] sm:$0xff]
    %236 = vset.pattern.permute.xlu0 0
    %237 = vperm.xlu0 %236, %v224
    %v238 = vpop.permute.xlu0 %237
    %v240 = vmul.f32 %v231, %v238
    %v241 = vmul.f32 %v232, %v238
    %v242 = vmul.f32 %v233, %v238
    %v243 = vmul.f32 %v234, %v238
    %245 = vset.pattern.permute.xlu0 1
    %246 = vperm.xlu0 %245, %v230
    %v247 = vpop.permute.xlu0 %246
    %v249 = vadd.f32 %v240, %v247
    %v250 = vadd.f32 %v241, %v247
    %v251 = vadd.f32 %v242, %v247
    %v252 = vadd.f32 %v243, %v247
    %v253 = vmax.f32 %v249, 0.0
    %v254 = vmax.f32 %v250, 0.0
    %v255 = vmax.f32 %v251, 0.0
    %v256 = vmax.f32 %v252, 0.0
    %257 = vst [vmem:[%s3] sm:$0xff] %v253
    %258 = vst [vmem:[%s3 + $0x8] sm:$0xff] %v254
    %259 = vst [vmem:[%s3 + $0x10] sm:$0xff] %v255
    %260 = vst [vmem:[%s3 + $0x18] sm:$0xff] %v256
  $region21: #{basic_conv_forward.1} parent=0 // pred_fallthru
    _
  // Predicated region
  $region22: #{basic_conv_forward.1} parent=0 // pred_check
    _
  $region23: #{basic_conv_forward.1} parent=0 // pred_check_branch
    %262 = sbr.rel (0) target = $region25
  $region24: #{basic_conv_forward.1} parent=0 // pred_region
    _
  $region25: #{basic_conv_forward.1} parent=0 // pred_fallthru
    _
  // Predicated region
  $region26: #{basic_conv_forward.1} parent=0 // pred_check
    _
  $region27: #{basic_conv_forward.1} parent=0 // pred_check_branch
    %264 = sbr.rel (0) target = $region29
  $region28: #{basic_conv_forward.1} parent=0 // pred_region
    _
  $region29: #{basic_conv_forward.1} parent=0 // pred_fallthru
    _

</llo_original>
